<compile_context>
chip_gen: v5e
topology: v5e:2x2
jax: 0.10.0
libtpu: 0.0.40
codegen_flags: <defaults>
</compile_context>

<pallas_src>
import functools

import jax
import jax.numpy as jnp
from jax import lax
from jax.experimental import pallas as pl
from jax.experimental.pallas import tpu as pltpu

LAMBDA_EDGE = 0.3
LAMBDA_IOU = 0.5
DICE_SMOOTH = 1e-6
IOU_SMOOTH = 1e-5


def _mask_edge_loss_kernel(H, stencil_dtype, has_partial,
                           ml_ref, el_ref, gt_ref, gtd_ref,
                           out_ref, acc_ref, carry_ref):
    """One row-tile of one image.

    Accumulates 4 per-image, per-lane partial sums (inter, prob-sum, gt-sum,
    bce-sum) into a (4, W) f32 scratch and writes the lane-reduced (1, 4, 1)
    output once per image at the last row tile."""
    r = pl.program_id(1)
    nr = pl.num_programs(1)
    f32 = jnp.float32

    @pl.when(r == 0)
    def _init():
        acc_ref[...] = jnp.zeros_like(acc_ref)

    gt_s = gt_ref[0].astype(stencil_dtype)              # (TH, W) stencil dtype
    TH, W = gt_s.shape
    zero = jnp.zeros((), stencil_dtype)

    if has_partial:                                     # last tile may hang past H
        rowg = lax.broadcasted_iota(jnp.int32, (TH, 1), 0) + r * TH
        valid = rowg < H                                # (TH, 1)
        gt_s = jnp.where(valid, gt_s, zero)

    # --- Dice / SoftIoU per-lane partial sums (f32 accumulation) ---------------
    ml = ml_ref[0].astype(f32)
    prob = 0.5 * jnp.tanh(0.5 * ml) + 0.5               # sigmoid via one EUP op
    if has_partial:
        prob = jnp.where(valid, prob, 0.0)
    gt_f = gt_s.astype(f32)                             # exact: gt is {0, 1}
    acc_ref[0:1, :] += jnp.sum(prob * gt_f, axis=0, keepdims=True)
    acc_ref[1:2, :] += jnp.sum(prob, axis=0, keepdims=True)
    acc_ref[2:3, :] += jnp.sum(gt_f, axis=0, keepdims=True)

    # --- separable 3x3 Sobel on zero-padded gt (8 rolls, broadcast masks) ------
    col = lax.broadcasted_iota(jnp.int32, (1, W), 1)
    not_first_col = col >= 1                            # (1, W)
    not_last_col = col <= W - 2
    rowi = lax.broadcasted_iota(jnp.int32, (TH, 1), 0)
    not_first_row = rowi >= 1                           # (TH, 1)
    not_last_row = rowi <= TH - 2

    # one-row halos: top row carried from the previous tile (scratch), bottom row
    # from a small dtype-aligned halo block of the next tile; zero at image edges.
    top = jnp.where(r > 0, carry_ref[...], zero)                       # (1, W)
    bot = jnp.where(r < nr - 1, gtd_ref[0][0:1, :].astype(stencil_dtype), zero)

    def hsmooth(x):                                     # x[:, j-1] + 2 x[:, j] + x[:, j+1]
        xl = jnp.where(not_first_col, pltpu.roll(x, 1, 1), zero)
        xr = jnp.where(not_last_col, pltpu.roll(x, W - 1, 1), zero)
        return xl + 2 * x + xr

    # vertical smooth v[i,j] = gt[i-1,j] + 2 gt[i,j] + gt[i+1,j]
    s_up = jnp.where(not_first_row, pltpu.roll(gt_s, 1, 0), top)
    s_dn = jnp.where(not_last_row, pltpu.roll(gt_s, TH - 1, 0), bot)
    v = s_up + 2 * gt_s + s_dn
    # gx[i,j] = v[i,j+1] - v[i,j-1]      (sobel_x = [[-1,0,1],[-2,0,2],[-1,0,1]])
    gx = (jnp.where(not_last_col, pltpu.roll(v, W - 1, 1), zero)
          - jnp.where(not_first_col, pltpu.roll(v, 1, 1), zero))

    # horizontal smooth h[i,j] = gt[i,j-1] + 2 gt[i,j] + gt[i,j+1]
    h = hsmooth(gt_s)
    h_top = hsmooth(top)
    h_bot = hsmooth(bot)
    # gy[i,j] = h[i+1,j] - h[i-1,j]      (sobel_y = sobel_x^T)
    gy = (jnp.where(not_last_row, pltpu.roll(h, TH - 1, 0), h_bot)
          - jnp.where(not_first_row, pltpu.roll(h, 1, 0), h_top))

    edge_gt = jnp.clip(jnp.abs(gx) + jnp.abs(gy), 0.0, 1.0)   # exact {0,1} even in bf16

    # carry this tile's last gt row as the next tile's top halo (row axis is sequential)
    carry_ref[...] = gt_s[TH - 1:TH, :]

    # --- numerically stable BCE-with-logits, reduced per lane ------------------
    x = el_ref[0].astype(f32)
    bce = jnp.maximum(x, 0.0) - x * edge_gt + jnp.log1p(jnp.exp(-jnp.abs(x)))
    if has_partial:
        bce = jnp.where(valid, bce, 0.0)
    acc_ref[3:4, :] += jnp.sum(bce, axis=0, keepdims=True)

    # --- single write-out per image ---------------------------------------------
    @pl.when(r == nr - 1)
    def _finalize():
        out_ref[...] = jnp.sum(acc_ref[...], axis=1, keepdims=True).reshape(1, 4, 1)


def _stencil_dtype():
    """bf16 stencil on bf16-native VPUs (v6e/v7x); f32 on older generations."""
    try:
        kind = jax.devices()[0].device_kind.lower()
    except Exception:
        kind = ""
    if any(t in kind for t in ("v6", "v7", "7x")):
        return jnp.bfloat16
    return jnp.float32


def _vmem_limit_bytes():
    """Explicit scoped-VMEM ceiling (defaults are only 16/32 MiB on v5e / v6e+)."""
    try:
        cap = pltpu.get_tpu_info().vmem_capacity_bytes
    except Exception:
        cap = 64 * 1024 * 1024          # conservative (v7x-sized) fallback
    return int(min(cap * 3 // 4, 96 * 1024 * 1024))


def _pick_row_tile(H, W, in_itemsize, stencil_itemsize, hb, vmem_limit):
    """Largest hb-divisible row tile whose per-step working set fits in ~half the
    explicit VMEM limit (double-buffered inputs + full-tile temporaries)."""
    budget = vmem_limit // 2
    bytes_per_elem = 3 * 2 * in_itemsize + 5 * 4 + 6 * stencil_itemsize
    max_elems = max(8 * 128, budget // bytes_per_elem)
    if H * W <= max_elems:
        return H
    th = max(hb, (max_elems // W) // hb * hb)
    return min(th, H)


def mask_edge_loss(mask_logits, edge_logits, mask_gt,
                   lambda_edge=LAMBDA_EDGE, lambda_iou=LAMBDA_IOU, row_tile=None):
    B, C, H, W = mask_logits.shape
    assert C == 1, "MaskEdgeLoss expects single-channel masks"
    # Narrow dtypes (bf16 logits, bf16/int8 gt) flow straight into the kernel.
    ml = mask_logits.reshape(B, H, W)
    el = edge_logits.reshape(B, H, W)
    gt = mask_gt.reshape(B, H, W)

    stencil_dtype = _stencil_dtype()
    stencil_itemsize = jnp.dtype(stencil_dtype).itemsize
    in_itemsize = max(ml.dtype.itemsize, el.dtype.itemsize, gt.dtype.itemsize)
    hb_native = {1: 32, 2: 16, 4: 8}.get(gt.dtype.itemsize, 8)   # native sublane tile
    vmem_limit = _vmem_limit_bytes()

    if row_tile is None:
        TH = _pick_row_tile(H, W, in_itemsize, stencil_itemsize, hb_native, vmem_limit)
    else:
        TH = min(int(row_tile), H)
        if TH < H:
            TH = max(8, TH // 8 * 8)                   # multi-tile path: 8-row aligned
    RT = (H + TH - 1) // TH                            # cdiv grid; last tile may be partial
    has_partial = (H % TH) != 0

    tile_map = lambda b, r: (b, r, 0)
    if RT > 1:
        HB = hb_native if TH % hb_native == 0 else 8   # dtype-aligned bottom-halo block
        nbl = TH // HB
        nbl_tot = (H + HB - 1) // HB
        dn_map = lambda b, r: (b, jnp.minimum((r + 1) * nbl, nbl_tot - 1), 0)
    else:
        HB = min(hb_native, H)
        dn_map = lambda b, r: (b, 0, 0)

    in_specs = [
        pl.BlockSpec((1, TH, W), tile_map),            # mask logits
        pl.BlockSpec((1, TH, W), tile_map),            # edge logits
        pl.BlockSpec((1, TH, W), tile_map),            # gt (current row tile)
        pl.BlockSpec((1, HB, W), dn_map),              # gt halo below (first row used)
    ]
    out_spec = pl.BlockSpec((1, 4, 1), lambda b, r: (b, 0, 0))
    out_shape = jax.ShapeDtypeStruct((B, 4, 1), jnp.float32)
    scratch_shapes = [
        pltpu.VMEM((4, W), jnp.float32),               # per-lane partial sums (4 quantities)
        pltpu.VMEM((1, W), stencil_dtype),             # carried top-halo row
    ]

    elems = B * H * W
    bytes_accessed = int(ml.size * ml.dtype.itemsize + el.size * el.dtype.itemsize
                         + gt.size * gt.dtype.itemsize
                         + B * RT * HB * W * gt.dtype.itemsize + 16 * B)
    cost = pl.CostEstimate(flops=30 * elems, transcendentals=3 * elems,
                           bytes_accessed=bytes_accessed)

    sums = pl.pallas_call(
        functools.partial(_mask_edge_loss_kernel, H, stencil_dtype, has_partial),
        out_shape=out_shape,
        grid=(B, RT),
        in_specs=in_specs,
        out_specs=out_spec,
        scratch_shapes=scratch_shapes,
        compiler_params=pltpu.CompilerParams(
            dimension_semantics=("parallel", "arbitrary"),   # batch across megacore
            vmem_limit_bytes=vmem_limit),
        cost_estimate=cost,
    )(ml, el, gt, gt)

    sums = sums.reshape(B, 4)
    inter, psum, gsum, bce_sum = sums[:, 0], sums[:, 1], sums[:, 2], sums[:, 3]

    # --- tiny scalar glue (matches the PyTorch module exactly) -----------------
    dice = (2.0 * inter + DICE_SMOOTH) / (psum + gsum + DICE_SMOOTH)
    loss_mask = 1.0 - jnp.mean(dice)
    loss_edge = jnp.sum(bce_sum) / elems                          # BCE mean reduction
    iou = (inter + IOU_SMOOTH) / (psum + gsum - inter + IOU_SMOOTH)
    loss_iou = 1.0 - jnp.mean(iou)
    return loss_mask + lambda_edge * loss_edge + lambda_iou * loss_iou


def _reference_loss(mask_logits, edge_logits, mask_gt,
                    lambda_edge=LAMBDA_EDGE, lambda_iou=LAMBDA_IOU):
    """Pure-JAX reference mirroring the PyTorch forward (for verification)."""
    B = mask_logits.shape[0]
    prob = jax.nn.sigmoid(mask_logits).reshape(B, -1)
    tgt = mask_gt.reshape(B, -1)
    inter = jnp.sum(prob * tgt, axis=1)
    dice = (2.0 * inter + DICE_SMOOTH) / (prob.sum(1) + tgt.sum(1) + DICE_SMOOTH)
    loss_mask = 1.0 - dice.mean()

    sobel_x = jnp.array([[-1, 0, 1], [-2, 0, 2], [-1, 0, 1]],
                        jnp.float32).reshape(1, 1, 3, 3)
    sobel_y = jnp.transpose(sobel_x, (0, 1, 3, 2))
    gx = lax.conv_general_dilated(mask_gt, sobel_x, (1, 1), [(1, 1), (1, 1)])
    gy = lax.conv_general_dilated(mask_gt, sobel_y, (1, 1), [(1, 1), (1, 1)])
    edge_gt = jnp.clip(jnp.abs(gx) + jnp.abs(gy), 0.0, 1.0)

    x = edge_logits
    loss_edge = jnp.mean(jnp.maximum(x, 0.0) - x * edge_gt
                         + jnp.log1p(jnp.exp(-jnp.abs(x))))

    union = prob.sum(1) + tgt.sum(1) - inter
    iou = (inter + IOU_SMOOTH) / (union + IOU_SMOOTH)
    loss_iou = 1.0 - iou.mean()
    return loss_mask + lambda_edge * loss_edge + lambda_iou * loss_iou


if __name__ == "__main__":
    # MaskEdgeLoss has no learnable parameters, so no weight init is needed.
    key = jax.random.PRNGKey(0)
    ks = jax.random.split(key, 9)

    # Case 1: module-sized small input (single-tile path), bf16 inputs.
    B, C, H, W = 2, 1, 16, 16
    ml1 = jax.random.normal(ks[0], (B, C, H, W), jnp.float32).astype(jnp.bfloat16)
    el1 = jax.random.normal(ks[1], (B, C, H, W), jnp.float32).astype(jnp.bfloat16)
    gt1 = (jax.random.uniform(ks[2], (B, C, H, W)) > 0.5).astype(jnp.bfloat16)
    loss1 = jax.block_until_ready(mask_edge_loss(ml1, el1, gt1))
    ref1 = jax.block_until_ready(_reference_loss(ml1.astype(jnp.float32),
                                                 el1.astype(jnp.float32),
                                                 gt1.astype(jnp.float32)))
    assert jnp.allclose(loss1, ref1, atol=1e-5, rtol=1e-4), (loss1, ref1)

    # Case 2: row-tiled path (carried top halo + dtype-aligned bottom halo).
    B2, H2, W2 = 2, 128, 128
    ml2 = jax.random.normal(ks[3], (B2, 1, H2, W2), jnp.float32).astype(jnp.bfloat16)
    el2 = jax.random.normal(ks[4], (B2, 1, H2, W2), jnp.float32).astype(jnp.bfloat16)
    gt2 = (jax.random.uniform(ks[5], (B2, 1, H2, W2)) > 0.5).astype(jnp.bfloat16)
    loss2 = jax.block_until_ready(mask_edge_loss(ml2, el2, gt2, row_tile=64))
    ref2 = jax.block_until_ready(_reference_loss(ml2.astype(jnp.float32),
                                                 el2.astype(jnp.float32),
                                                 gt2.astype(jnp.float32)))
    assert jnp.allclose(loss2, ref2, atol=1e-5, rtol=1e-4), (loss2, ref2)

    # Case 3: awkward H -> partial last tile handled by in-kernel row masking.
    B3, H3, W3 = 1, 72, 64
    ml3 = jax.random.normal(ks[6], (B3, 1, H3, W3), jnp.float32)
    el3 = jax.random.normal(ks[7], (B3, 1, H3, W3), jnp.float32)
    gt3 = (jax.random.uniform(ks[8], (B3, 1, H3, W3)) > 0.5).astype(jnp.float32)
    loss3 = jax.block_until_ready(mask_edge_loss(ml3, el3, gt3, row_tile=32))
    ref3 = jax.block_until_ready(_reference_loss(ml3, el3, gt3))
    assert jnp.allclose(loss3, ref3, atol=1e-5, rtol=1e-4), (loss3, ref3)

    print("KERNEL_OK")
</pallas_src>

<mosaic_0001>
module attributes {stable_mosaic.version = 11 : i64} {
  func.func @_mask_edge_loss_kernel(%arg0: i32, %arg1: i32, %arg2: memref<1x16x16xbf16, #tpu.memory_space<vmem>>, %arg3: memref<1x16x16xbf16, #tpu.memory_space<vmem>>, %arg4: memref<1x16x16xbf16, #tpu.memory_space<vmem>>, %arg5: memref<1x16x16xbf16, #tpu.memory_space<vmem>>, %arg6: memref<1x4x1xf32, #tpu.memory_space<vmem>>, %arg7: memref<4x16xf32, #tpu.memory_space<vmem>>, %arg8: memref<1x16xf32, #tpu.memory_space<vmem>>) attributes {dimension_semantics = [#tpu.dimension_semantics<parallel>, #tpu.dimension_semantics<arbitrary>], iteration_bounds = array<i64: 2, 1>, scalar_prefetch = 0 : i64, scratch_operands = 2 : i64, tpu.core_type = #tpu.core_type<tc>, window_params = [{transform_indices = @transform_0, window_bounds = array<i64: 1, 16, 16>}, {transform_indices = @transform_1, window_bounds = array<i64: 1, 16, 16>}, {transform_indices = @transform_2, window_bounds = array<i64: 1, 16, 16>}, {transform_indices = @transform_3, window_bounds = array<i64: 1, 16, 16>}, {transform_indices = @transform_4, window_bounds = array<i64: 1, 4, 1>}]} {
    %c0_i32 = arith.constant 0 : i32
    %0 = arith.cmpi eq, %arg1, %c0_i32 : i32
    %1 = arith.extui %0 : i1 to i32
    %c0_i32_0 = arith.constant 0 : i32
    %2 = arith.cmpi ne, %1, %c0_i32_0 : i32
    scf.if %2 {
      %cst_70 = arith.constant 0.000000e+00 : f32
      %157 = vector.broadcast %cst_70 : f32 to vector<4x16xf32>
      %c0_71 = arith.constant 0 : index
      %c0_72 = arith.constant 0 : index
      %158 = vector.load %arg7[%c0_71, %c0_72] : memref<4x16xf32, #tpu.memory_space<vmem>>, vector<4x16xf32>
      tpu.vector_store %arg7[%c0_71, %c0_72], %157 {strides = array<i32>} : memref<4x16xf32, #tpu.memory_space<vmem>>, vector<4x16xf32>,
    } else {
    }
    %c0 = arith.constant 0 : index
    %c0_1 = arith.constant 0 : index
    %c0_2 = arith.constant 0 : index
    %3 = vector.load %arg4[%c0, %c0_1, %c0_2] : memref<1x16x16xbf16, #tpu.memory_space<vmem>>, vector<1x16x16xbf16>
    %4 = vector.shape_cast %3 : vector<1x16x16xbf16> to vector<16x16xbf16>
    %5 = arith.extf %4 : vector<16x16xbf16> to vector<16x16xf32>
    %c0_3 = arith.constant 0 : index
    %c0_4 = arith.constant 0 : index
    %c0_5 = arith.constant 0 : index
    %6 = vector.load %arg2[%c0_3, %c0_4, %c0_5] : memref<1x16x16xbf16, #tpu.memory_space<vmem>>, vector<1x16x16xbf16>
    %7 = vector.shape_cast %6 : vector<1x16x16xbf16> to vector<16x16xbf16>
    %8 = arith.extf %7 : vector<16x16xbf16> to vector<16x16xf32>
    %cst = arith.constant 5.000000e-01 : f32
    %9 = vector.broadcast %cst : f32 to vector<16x16xf32>
    %10 = arith.mulf %9, %8 : vector<16x16xf32>
    %11 = math.tanh %10 : vector<16x16xf32>
    %cst_6 = arith.constant 5.000000e-01 : f32
    %12 = vector.broadcast %cst_6 : f32 to vector<16x16xf32>
    %13 = arith.mulf %12, %11 : vector<16x16xf32>
    %cst_7 = arith.constant 5.000000e-01 : f32
    %14 = vector.broadcast %cst_7 : f32 to vector<16x16xf32>
    %15 = arith.addf %13, %14 : vector<16x16xf32>
    %c0_8 = arith.constant 0 : index
    %c0_9 = arith.constant 0 : index
    %16 = vector.load %arg7[%c0_8, %c0_9] : memref<4x16xf32, #tpu.memory_space<vmem>>, vector<1x16xf32>
    %17 = arith.mulf %15, %5 : vector<16x16xf32>
    %cst_10 = arith.constant dense<0.000000e+00> : vector<16xf32>
    %18 = vector.multi_reduction <add>, %17, %cst_10 [0] : vector<16x16xf32> to vector<16xf32>
    %19 = vector.shape_cast %18 : vector<16xf32> to vector<1x16xf32>
    %20 = arith.addf %16, %19 : vector<1x16xf32>
    %c0_11 = arith.constant 0 : index
    %c0_12 = arith.constant 0 : index
    %21 = vector.load %arg7[%c0_11, %c0_12] : memref<4x16xf32, #tpu.memory_space<vmem>>, vector<1x16xf32>
    tpu.vector_store %arg7[%c0_11, %c0_12], %20 {strides = array<i32>} : memref<4x16xf32, #tpu.memory_space<vmem>>, vector<1x16xf32>,
    %c1 = arith.constant 1 : index
    %c0_13 = arith.constant 0 : index
    %22 = vector.load %arg7[%c1, %c0_13] : memref<4x16xf32, #tpu.memory_space<vmem>>, vector<1x16xf32>
    %cst_14 = arith.constant dense<0.000000e+00> : vector<16xf32>
    %23 = vector.multi_reduction <add>, %15, %cst_14 [0] : vector<16x16xf32> to vector<16xf32>
    %24 = vector.shape_cast %23 : vector<16xf32> to vector<1x16xf32>
    %25 = arith.addf %22, %24 : vector<1x16xf32>
    %c1_15 = arith.constant 1 : index
    %c0_16 = arith.constant 0 : index
    %26 = vector.load %arg7[%c1_15, %c0_16] : memref<4x16xf32, #tpu.memory_space<vmem>>, vector<1x16xf32>
    tpu.vector_store %arg7[%c1_15, %c0_16], %25 {strides = array<i32>} : memref<4x16xf32, #tpu.memory_space<vmem>>, vector<1x16xf32>,
    %c2 = arith.constant 2 : index
    %c0_17 = arith.constant 0 : index
    %27 = vector.load %arg7[%c2, %c0_17] : memref<4x16xf32, #tpu.memory_space<vmem>>, vector<1x16xf32>
    %cst_18 = arith.constant dense<0.000000e+00> : vector<16xf32>
    %28 = vector.multi_reduction <add>, %5, %cst_18 [0] : vector<16x16xf32> to vector<16xf32>
    %29 = vector.shape_cast %28 : vector<16xf32> to vector<1x16xf32>
    %30 = arith.addf %27, %29 : vector<1x16xf32>
    %c2_19 = arith.constant 2 : index
    %c0_20 = arith.constant 0 : index
    %31 = vector.load %arg7[%c2_19, %c0_20] : memref<4x16xf32, #tpu.memory_space<vmem>>, vector<1x16xf32>
    tpu.vector_store %arg7[%c2_19, %c0_20], %30 {strides = array<i32>} : memref<4x16xf32, #tpu.memory_space<vmem>>, vector<1x16xf32>,
    %32 = tpu.iota {dimensions = array<i32: 1>} : vector<1x16xi32>
    %c1_i32 = arith.constant 1 : i32
    %33 = vector.broadcast %c1_i32 : i32 to vector<1x16xi32>
    %34 = arith.cmpi sge, %32, %33 : vector<1x16xi32>
    %c14_i32 = arith.constant 14 : i32
    %35 = vector.broadcast %c14_i32 : i32 to vector<1x16xi32>
    %36 = arith.cmpi sle, %32, %35 : vector<1x16xi32>
    %37 = tpu.iota {dimensions = array<i32: 0>} : vector<16x1xi32>
    %c1_i32_21 = arith.constant 1 : i32
    %38 = vector.broadcast %c1_i32_21 : i32 to vector<16x1xi32>
    %39 = arith.cmpi sge, %37, %38 : vector<16x1xi32>
    %c14_i32_22 = arith.constant 14 : i32
    %40 = vector.broadcast %c14_i32_22 : i32 to vector<16x1xi32>
    %41 = arith.cmpi sle, %37, %40 : vector<16x1xi32>
    %c0_i32_23 = arith.constant 0 : i32
    %42 = arith.cmpi sgt, %arg1, %c0_i32_23 : i32
    %c0_24 = arith.constant 0 : index
    %c0_25 = arith.constant 0 : index
    %43 = vector.load %arg8[%c0_24, %c0_25] : memref<1x16xf32, #tpu.memory_space<vmem>>, vector<1x16xf32>
    %cst_26 = arith.constant 0.000000e+00 : f32
    %44 = vector.broadcast %cst_26 : f32 to vector<1x16xf32>
    %45 = arith.select %42, %43, %44 : vector<1x16xf32>
    %c0_i32_27 = arith.constant 0 : i32
    %46 = arith.cmpi slt, %arg1, %c0_i32_27 : i32
    %c0_28 = arith.constant 0 : index
    %c0_29 = arith.constant 0 : index
    %c0_30 = arith.constant 0 : index
    %47 = vector.load %arg5[%c0_28, %c0_29, %c0_30] : memref<1x16x16xbf16, #tpu.memory_space<vmem>>, vector<1x16x16xbf16>
    %48 = vector.shape_cast %47 : vector<1x16x16xbf16> to vector<16x16xbf16>
    %49 = vector.extract_strided_slice %48 {offsets = [0, 0], sizes = [1, 16], strides = [1, 1]} : vector<16x16xbf16> to vector<1x16xbf16>
    %50 = arith.extf %49 : vector<1x16xbf16> to vector<1x16xf32>
    %cst_31 = arith.constant 0.000000e+00 : f32
    %51 = vector.broadcast %cst_31 : f32 to vector<1x16xf32>
    %52 = arith.select %46, %50, %51 : vector<1x16xf32>
    %c1_i32_32 = arith.constant 1 : i32
    %53 = tpu.dynamic_rotate %5 by %c1_i32_32 dim 0 : vector<16x16xf32>, i32 -> vector<16x16xf32>
    %54 = vector.shape_cast %39 : vector<16x1xi1> to vector<16x1xi1>
    %55 = vector.broadcast %54 : vector<16x1xi1> to vector<16x16xi1>
    %56 = vector.shape_cast %45 : vector<1x16xf32> to vector<1x16xf32>
    %57 = vector.broadcast %56 : vector<1x16xf32> to vector<16x16xf32>
    %58 = arith.select %55, %53, %57 : vector<16x16xi1>, vector<16x16xf32>
    %c15_i32 = arith.constant 15 : i32
    %59 = tpu.dynamic_rotate %5 by %c15_i32 dim 0 : vector<16x16xf32>, i32 -> vector<16x16xf32>
    %60 = vector.shape_cast %41 : vector<16x1xi1> to vector<16x1xi1>
    %61 = vector.broadcast %60 : vector<16x1xi1> to vector<16x16xi1>
    %62 = vector.shape_cast %52 : vector<1x16xf32> to vector<1x16xf32>
    %63 = vector.broadcast %62 : vector<1x16xf32> to vector<16x16xf32>
    %64 = arith.select %61, %59, %63 : vector<16x16xi1>, vector<16x16xf32>
    %cst_33 = arith.constant 2.000000e+00 : f32
    %65 = vector.broadcast %cst_33 : f32 to vector<16x16xf32>
    %66 = arith.mulf %65, %5 : vector<16x16xf32>
    %67 = arith.addf %58, %66 : vector<16x16xf32>
    %68 = arith.addf %67, %64 : vector<16x16xf32>
    %c15_i32_34 = arith.constant 15 : i32
    %69 = tpu.dynamic_rotate %68 by %c15_i32_34 dim 1 : vector<16x16xf32>, i32 -> vector<16x16xf32>
    %cst_35 = arith.constant 0.000000e+00 : f32
    %70 = vector.shape_cast %36 : vector<1x16xi1> to vector<1x16xi1>
    %71 = vector.broadcast %70 : vector<1x16xi1> to vector<16x16xi1>
    %72 = vector.broadcast %cst_35 : f32 to vector<16x16xf32>
    %73 = arith.select %71, %69, %72 : vector<16x16xi1>, vector<16x16xf32>
    %c1_i32_36 = arith.constant 1 : i32
    %74 = tpu.dynamic_rotate %68 by %c1_i32_36 dim 1 : vector<16x16xf32>, i32 -> vector<16x16xf32>
    %cst_37 = arith.constant 0.000000e+00 : f32
    %75 = vector.shape_cast %34 : vector<1x16xi1> to vector<1x16xi1>
    %76 = vector.broadcast %75 : vector<1x16xi1> to vector<16x16xi1>
    %77 = vector.broadcast %cst_37 : f32 to vector<16x16xf32>
    %78 = arith.select %76, %74, %77 : vector<16x16xi1>, vector<16x16xf32>
    %79 = arith.subf %73, %78 : vector<16x16xf32>
    %c1_i32_38 = arith.constant 1 : i32
    %80 = tpu.dynamic_rotate %5 by %c1_i32_38 dim 1 : vector<16x16xf32>, i32 -> vector<16x16xf32>
    %cst_39 = arith.constant 0.000000e+00 : f32
    %81 = vector.shape_cast %34 : vector<1x16xi1> to vector<1x16xi1>
    %82 = vector.broadcast %81 : vector<1x16xi1> to vector<16x16xi1>
    %83 = vector.broadcast %cst_39 : f32 to vector<16x16xf32>
    %84 = arith.select %82, %80, %83 : vector<16x16xi1>, vector<16x16xf32>
    %c15_i32_40 = arith.constant 15 : i32
    %85 = tpu.dynamic_rotate %5 by %c15_i32_40 dim 1 : vector<16x16xf32>, i32 -> vector<16x16xf32>
    %cst_41 = arith.constant 0.000000e+00 : f32
    %86 = vector.shape_cast %36 : vector<1x16xi1> to vector<1x16xi1>
    %87 = vector.broadcast %86 : vector<1x16xi1> to vector<16x16xi1>
    %88 = vector.broadcast %cst_41 : f32 to vector<16x16xf32>
    %89 = arith.select %87, %85, %88 : vector<16x16xi1>, vector<16x16xf32>
    %cst_42 = arith.constant 2.000000e+00 : f32
    %90 = vector.broadcast %cst_42 : f32 to vector<16x16xf32>
    %91 = arith.mulf %90, %5 : vector<16x16xf32>
    %92 = arith.addf %84, %91 : vector<16x16xf32>
    %93 = arith.addf %92, %89 : vector<16x16xf32>
    %c1_i32_43 = arith.constant 1 : i32
    %94 = tpu.dynamic_rotate %45 by %c1_i32_43 dim 1 : vector<1x16xf32>, i32 -> vector<1x16xf32>
    %cst_44 = arith.constant 0.000000e+00 : f32
    %95 = vector.broadcast %cst_44 : f32 to vector<1x16xf32>
    %96 = arith.select %34, %94, %95 : vector<1x16xi1>, vector<1x16xf32>
    %c15_i32_45 = arith.constant 15 : i32
    %97 = tpu.dynamic_rotate %45 by %c15_i32_45 dim 1 : vector<1x16xf32>, i32 -> vector<1x16xf32>
    %cst_46 = arith.constant 0.000000e+00 : f32
    %98 = vector.broadcast %cst_46 : f32 to vector<1x16xf32>
    %99 = arith.select %36, %97, %98 : vector<1x16xi1>, vector<1x16xf32>
    %cst_47 = arith.constant 2.000000e+00 : f32
    %100 = vector.broadcast %cst_47 : f32 to vector<1x16xf32>
    %101 = arith.mulf %100, %45 : vector<1x16xf32>
    %102 = arith.addf %96, %101 : vector<1x16xf32>
    %103 = arith.addf %102, %99 : vector<1x16xf32>
    %c1_i32_48 = arith.constant 1 : i32
    %104 = tpu.dynamic_rotate %52 by %c1_i32_48 dim 1 : vector<1x16xf32>, i32 -> vector<1x16xf32>
    %cst_49 = arith.constant 0.000000e+00 : f32
    %105 = vector.broadcast %cst_49 : f32 to vector<1x16xf32>
    %106 = arith.select %34, %104, %105 : vector<1x16xi1>, vector<1x16xf32>
    %c15_i32_50 = arith.constant 15 : i32
    %107 = tpu.dynamic_rotate %52 by %c15_i32_50 dim 1 : vector<1x16xf32>, i32 -> vector<1x16xf32>
    %cst_51 = arith.constant 0.000000e+00 : f32
    %108 = vector.broadcast %cst_51 : f32 to vector<1x16xf32>
    %109 = arith.select %36, %107, %108 : vector<1x16xi1>, vector<1x16xf32>
    %cst_52 = arith.constant 2.000000e+00 : f32
    %110 = vector.broadcast %cst_52 : f32 to vector<1x16xf32>
    %111 = arith.mulf %110, %52 : vector<1x16xf32>
    %112 = arith.addf %106, %111 : vector<1x16xf32>
    %113 = arith.addf %112, %109 : vector<1x16xf32>
    %c15_i32_53 = arith.constant 15 : i32
    %114 = tpu.dynamic_rotate %93 by %c15_i32_53 dim 0 : vector<16x16xf32>, i32 -> vector<16x16xf32>
    %115 = vector.shape_cast %41 : vector<16x1xi1> to vector<16x1xi1>
    %116 = vector.broadcast %115 : vector<16x1xi1> to vector<16x16xi1>
    %117 = vector.shape_cast %113 : vector<1x16xf32> to vector<1x16xf32>
    %118 = vector.broadcast %117 : vector<1x16xf32> to vector<16x16xf32>
    %119 = arith.select %116, %114, %118 : vector<16x16xi1>, vector<16x16xf32>
    %c1_i32_54 = arith.constant 1 : i32
    %120 = tpu.dynamic_rotate %93 by %c1_i32_54 dim 0 : vector<16x16xf32>, i32 -> vector<16x16xf32>
    %121 = vector.shape_cast %39 : vector<16x1xi1> to vector<16x1xi1>
    %122 = vector.broadcast %121 : vector<16x1xi1> to vector<16x16xi1>
    %123 = vector.shape_cast %103 : vector<1x16xf32> to vector<1x16xf32>
    %124 = vector.broadcast %123 : vector<1x16xf32> to vector<16x16xf32>
    %125 = arith.select %122, %120, %124 : vector<16x16xi1>, vector<16x16xf32>
    %126 = arith.subf %119, %125 : vector<16x16xf32>
    %127 = math.absf %79 : vector<16x16xf32>
    %128 = math.absf %126 : vector<16x16xf32>
    %129 = arith.addf %127, %128 : vector<16x16xf32>
    %cst_55 = arith.constant 0.000000e+00 : f32
    %cst_56 = arith.constant 1.000000e+00 : f32
    %130 = vector.broadcast %cst_55 : f32 to vector<16x16xf32>
    %131 = arith.maximumf %130, %129 : vector<16x16xf32>
    %132 = vector.broadcast %cst_56 : f32 to vector<16x16xf32>
    %133 = arith.minimumf %132, %131 : vector<16x16xf32>
    %134 = vector.extract_strided_slice %5 {offsets = [15, 0], sizes = [1, 16], strides = [1, 1]} : vector<16x16xf32> to vector<1x16xf32>
    %c0_57 = arith.constant 0 : index
    %c0_58 = arith.constant 0 : index
    %135 = vector.load %arg8[%c0_57, %c0_58] : memref<1x16xf32, #tpu.memory_space<vmem>>, vector<1x16xf32>
    tpu.vector_store %arg8[%c0_57, %c0_58], %134 {strides = array<i32>} : memref<1x16xf32, #tpu.memory_space<vmem>>, vector<1x16xf32>,
    %c0_59 = arith.constant 0 : index
    %c0_60 = arith.constant 0 : index
    %c0_61 = arith.constant 0 : index
    %136 = vector.load %arg3[%c0_59, %c0_60, %c0_61] : memref<1x16x16xbf16, #tpu.memory_space<vmem>>, vector<1x16x16xbf16>
    %137 = vector.shape_cast %136 : vector<1x16x16xbf16> to vector<16x16xbf16>
    %138 = arith.extf %137 : vector<16x16xbf16> to vector<16x16xf32>
    %cst_62 = arith.constant 0.000000e+00 : f32
    %139 = vector.broadcast %cst_62 : f32 to vector<16x16xf32>
    %140 = arith.maximumf %138, %139 : vector<16x16xf32>
    %141 = arith.mulf %138, %133 : vector<16x16xf32>
    %142 = arith.subf %140, %141 : vector<16x16xf32>
    %143 = math.absf %138 : vector<16x16xf32>
    %cst_63 = arith.constant 0.000000e+00 : f32
    %144 = vector.broadcast %cst_63 : f32 to vector<16x16xf32>
    %145 = arith.subf %144, %143 : vector<16x16xf32>
    %146 = math.exp %145 : vector<16x16xf32>
    %147 = math.log1p %146 : vector<16x16xf32>
    %148 = arith.addf %142, %147 : vector<16x16xf32>
    %c3 = arith.constant 3 : index
    %c0_64 = arith.constant 0 : index
    %149 = vector.load %arg7[%c3, %c0_64] : memref<4x16xf32, #tpu.memory_space<vmem>>, vector<1x16xf32>
    %cst_65 = arith.constant dense<0.000000e+00> : vector<16xf32>
    %150 = vector.multi_reduction <add>, %148, %cst_65 [0] : vector<16x16xf32> to vector<16xf32>
    %151 = vector.shape_cast %150 : vector<16xf32> to vector<1x16xf32>
    %152 = arith.addf %149, %151 : vector<1x16xf32>
    %c3_66 = arith.constant 3 : index
    %c0_67 = arith.constant 0 : index
    %153 = vector.load %arg7[%c3_66, %c0_67] : memref<4x16xf32, #tpu.memory_space<vmem>>, vector<1x16xf32>
    tpu.vector_store %arg7[%c3_66, %c0_67], %152 {strides = array<i32>} : memref<4x16xf32, #tpu.memory_space<vmem>>, vector<1x16xf32>,
    %c0_i32_68 = arith.constant 0 : i32
    %154 = arith.cmpi eq, %arg1, %c0_i32_68 : i32
    %155 = arith.extui %154 : i1 to i32
    %c0_i32_69 = arith.constant 0 : i32
    %156 = arith.cmpi ne, %155, %c0_i32_69 : i32
    scf.if %156 {
      %c0_70 = arith.constant 0 : index
      %c0_71 = arith.constant 0 : index
      %157 = vector.load %arg7[%c0_70, %c0_71] : memref<4x16xf32, #tpu.memory_space<vmem>>, vector<4x16xf32>
      %cst_72 = arith.constant dense<0.000000e+00> : vector<4xf32>
      %158 = vector.multi_reduction <add>, %157, %cst_72 [1] : vector<4x16xf32> to vector<4xf32>
      %159 = vector.shape_cast %158 : vector<4xf32> to vector<4x1xf32>
      %160 = vector.shape_cast %159 : vector<4x1xf32> to vector<1x4x1xf32>
      %c0_73 = arith.constant 0 : index
      %c0_74 = arith.constant 0 : index
      %c0_75 = arith.constant 0 : index
      %161 = vector.load %arg6[%c0_73, %c0_74, %c0_75] : memref<1x4x1xf32, #tpu.memory_space<vmem>>, vector<1x4x1xf32>
      tpu.vector_store %arg6[%c0_73, %c0_74, %c0_75], %160 {strides = array<i32>} : memref<1x4x1xf32, #tpu.memory_space<vmem>>, vector<1x4x1xf32>,
    } else {
    }
    return
  }
  func.func @transform_0(%arg0: i32, %arg1: i32) -> (i32, i32, i32) {
    %c0_i32 = arith.constant 0 : i32
    %c0_i32_0 = arith.constant 0 : i32
    return %arg0, %arg1, %c0_i32 : i32, i32, i32
  }
  func.func @transform_1(%arg0: i32, %arg1: i32) -> (i32, i32, i32) {
    %c0_i32 = arith.constant 0 : i32
    %c0_i32_0 = arith.constant 0 : i32
    return %arg0, %arg1, %c0_i32 : i32, i32, i32
  }
  func.func @transform_2(%arg0: i32, %arg1: i32) -> (i32, i32, i32) {
    %c0_i32 = arith.constant 0 : i32
    %c0_i32_0 = arith.constant 0 : i32
    return %arg0, %arg1, %c0_i32 : i32, i32, i32
  }
  func.func @transform_3(%arg0: i32, %arg1: i32) -> (i32, i32, i32) {
    %c0_i32 = arith.constant 0 : i32
    %c0_i32_0 = arith.constant 0 : i32
    %c0_i32_1 = arith.constant 0 : i32
    return %arg0, %c0_i32, %c0_i32_0 : i32, i32, i32
  }
  func.func @transform_4(%arg0: i32, %arg1: i32) -> (i32, i32, i32) {
    %c0_i32 = arith.constant 0 : i32
    %c0_i32_0 = arith.constant 0 : i32
    %c0_i32_1 = arith.constant 0 : i32
    return %arg0, %c0_i32, %c0_i32_0 : i32, i32, i32
  }
}

</mosaic_0001>

<llo_original>
// kernel: tpu_custom_call.1
$region0: #{tpu_custom_call.1}
  #allocation0 [shape = 'u32[]', space=smem, size = 0x4, offset = 0x4, fixed_abs, tag = 'smem constant byte address 0x4 - core index']
  #allocation1 [shape = 'u32[72,128]{1,0:T(1,128)}', space=vmem, size = 0x9000, scoped, tag = 'internal scratch']
  #allocation2 [shape = 'f32[4,16]{1,0:T(4,128)}', space=vmem, size = 0x800, scoped, tag = 'scratch operand']
  #allocation3 [shape = 'f32[1,16]{1,0:T(1,128)}', space=vmem, size = 0x200, scoped, tag = 'scratch operand']
  %s0 = inlined_call_operand.hbm [shape: bf16[2,16,16], index: 0, kind: input, shape index: {}]
  %s1 = inlined_call_operand.hbm [shape: bf16[2,16,16], index: 1, kind: input, shape index: {}]
  %s2 = inlined_call_operand.hbm [shape: bf16[2,16,16], index: 2, kind: input, shape index: {}]
  %s3 = inlined_call_operand.hbm [shape: bf16[2,16,16], index: 3, kind: input, shape index: {}]
  %s4 = inlined_call_operand.vmem [shape: f32[2,4,1], index: 4, kind: output, shape index: {}]
  %s5 = sld [smem:[#allocation0]]
  $region73: #{tpu_custom_call.1} parent=0
    _
  %s7 = ssub.s32 1, %s5
  %s8 = scalar_select 0, %s7, %s5
  $region1: #{tpu_custom_call.1} parent=0
    #allocation4 [shape = 'u8[8192]{0}', space=vmem, size = 0x2000, scoped, tag = 'input window, operand 0']
    #allocation5 [shape = 's32[2]{0}', space=sflag, size = 0x8, scoped, tag = 'scoped memory for tpu_custom_call.1']
    #allocation6 [shape = 'u8[8192]{0}', space=vmem, size = 0x2000, scoped, tag = 'input window, operand 1']
    #allocation7 [shape = 's32[2]{0}', space=sflag, size = 0x8, scoped, tag = 'scoped memory for tpu_custom_call.1']
    #allocation8 [shape = 'u8[8192]{0}', space=vmem, size = 0x2000, scoped, tag = 'input window, operand 2']
    #allocation9 [shape = 'u8[8192]{0}', space=vmem, size = 0x2000, scoped, tag = 'input window, operand 3']
    #allocation10 [shape = 's32[2]{0}', space=sflag, size = 0x8, scoped, tag = 'scoped memory for tpu_custom_call.1']
    %9 = vsyncpa [#allocation5], 0
    %s10 = scalar_lea.sflag [#allocation5], 1
    %11 = vsyncpa %s10, 0
    %12 = vsyncpa [#allocation7], 0
    %s13 = scalar_lea.sflag [#allocation7], 1
    %14 = vsyncpa %s13, 0
    %15 = vsyncpa [#allocation10], 0
    %s16 = scalar_lea.sflag [#allocation10], 1
    %17 = vsyncpa %s16, 0
    loop: start=0, step=1, limit=4
    $region2: #{tpu_custom_call.1} parent=1 // loop_pre_header
      _
    $region3: #{tpu_custom_call.1} parent=1 // loop_header
      %s19 = sphi 0, %s23
      %p20 = scmp.ge.s32.totalorder %s19, 4
      %s26 = sphi 0, %s38
      %s27 = sphi 0, %s34
      %s28 = sphi 0, %s26
      %s29 = sphi 0, %s27
      %s30 = sphi 0, %s28
      %s31 = sphi 0, %s29
      %s43 = sphi 0, %s45
      %s46 = sphi 0, %s43
      %s47 = sphi 0, %s46
      %s63 = sphi 0, %s47
      %s71 = sphi 0, %s73
      %s74 = sphi 0, %s71
      %s75 = sphi 0, %s74
      %s91 = sphi 0, %s75
      %s99 = sphi 0, %s101
      %s102 = sphi 0, %s99
      %s103 = sphi 0, %s102
      %s119 = sphi 0, %s103
      %s125 = sphi 0, %s127
      %s128 = sphi 0, %s125
      %s129 = sphi 0, %s128
      %s145 = sphi 0, %s129
      %s151 = sphi 0, %s153
      %s154 = sphi 0, %s151
      %s155 = sphi 0, %s154
      %s171 = sphi 0, %s155
    $region4: #{tpu_custom_call.1} parent=1 // loop_header_branch
      %22 = sbr.rel (%p20) target = $region8
    $region5: #{tpu_custom_call.1} parent=1 // loop_body
      %s24 = ssub.s32 %s19, 1
      %s25 = ssub.s32 %s19, 2
      %s32 = sadd.s32 1, %s27
      %p33 = scmp.ge.s32.totalorder %s32, 1
      %s34 = scalar_select %p33, 0, %s32
      %s35 = sadd.s32 1, %s26
      %s36 = scalar_select %p33, %s35, %s26
      %p37 = scmp.ge.s32.totalorder %s36, 2
      %s38 = scalar_select %p37, 0, %s36
      %s39 = ssub.s32 %s26, %s38
      %s40 = ssub.s32 %s27, %s34
      %s41 = sor.u32 %s39, %s40
      %p42 = scmp.eq.s32.totalorder %s41, 0
      %s44 = sadd.s32 %s43, 1
      %s45 = scalar_select %p42, %s43, %s44
      %p48 = pneg %p42
      %p49 = scmp.eq.s32.totalorder %s19, 1
      %p50 = por %p48, %p49
      %p51 = scmp.ne.s32.totalorder %s43, %s46
      %p52 = scmp.eq.s32.totalorder %s19, 0
      %p53 = por %p51, %p52
      %p54 = scmp.ne.s32.totalorder %s43, %s46
      %p55 = scmp.eq.s32.totalorder %s24, 1
      %p56 = por %p54, %p55
      %p57 = scmp.ne.s32.totalorder %s46, %s47
      %p58 = scmp.eq.s32.totalorder %s24, 0
      %p59 = por %p57, %p58
      %p60 = scmp.ne.s32.totalorder %s46, %s47
      %p61 = scmp.eq.s32.totalorder %s25, 1
      %p62 = por %p60, %p61
      %p64 = scmp.ne.s32.totalorder %s47, %s63
      %p65 = scmp.eq.s32.totalorder %s25, 0
      %p66 = por %p64, %p65
      %s67 = ssub.s32 %s26, %s38
      %s68 = ssub.s32 %s27, %s34
      %s69 = sor.u32 %s67, %s68
      %p70 = scmp.eq.s32.totalorder %s69, 0
      %s72 = sadd.s32 %s71, 1
      %s73 = scalar_select %p70, %s71, %s72
      %p76 = pneg %p70
      %p77 = scmp.eq.s32.totalorder %s19, 1
      %p78 = por %p76, %p77
      %p79 = scmp.ne.s32.totalorder %s71, %s74
      %p80 = scmp.eq.s32.totalorder %s19, 0
      %p81 = por %p79, %p80
      %p82 = scmp.ne.s32.totalorder %s71, %s74
      %p83 = scmp.eq.s32.totalorder %s24, 1
      %p84 = por %p82, %p83
      %p85 = scmp.ne.s32.totalorder %s74, %s75
      %p86 = scmp.eq.s32.totalorder %s24, 0
      %p87 = por %p85, %p86
      %p88 = scmp.ne.s32.totalorder %s74, %s75
      %p89 = scmp.eq.s32.totalorder %s25, 1
      %p90 = por %p88, %p89
      %p92 = scmp.ne.s32.totalorder %s75, %s91
      %p93 = scmp.eq.s32.totalorder %s25, 0
      %p94 = por %p92, %p93
      %s95 = ssub.s32 %s26, %s38
      %s96 = ssub.s32 %s27, %s34
      %s97 = sor.u32 %s95, %s96
      %p98 = scmp.eq.s32.totalorder %s97, 0
      %s100 = sadd.s32 %s99, 1
      %s101 = scalar_select %p98, %s99, %s100
      %p104 = pneg %p98
      %p105 = scmp.eq.s32.totalorder %s19, 1
      %p106 = por %p104, %p105
      %p107 = scmp.ne.s32.totalorder %s99, %s102
      %p108 = scmp.eq.s32.totalorder %s19, 0
      %p109 = por %p107, %p108
      %p110 = scmp.ne.s32.totalorder %s99, %s102
      %p111 = scmp.eq.s32.totalorder %s24, 1
      %p112 = por %p110, %p111
      %p113 = scmp.ne.s32.totalorder %s102, %s103
      %p114 = scmp.eq.s32.totalorder %s24, 0
      %p115 = por %p113, %p114
      %p116 = scmp.ne.s32.totalorder %s102, %s103
      %p117 = scmp.eq.s32.totalorder %s25, 1
      %p118 = por %p116, %p117
      %p120 = scmp.ne.s32.totalorder %s103, %s119
      %p121 = scmp.eq.s32.totalorder %s25, 0
      %p122 = por %p120, %p121
      %s123 = ssub.s32 %s26, %s38
      %p124 = scmp.eq.s32.totalorder %s123, 0
      %s126 = sadd.s32 %s125, 1
      %s127 = scalar_select %p124, %s125, %s126
      %p130 = pneg %p124
      %p131 = scmp.eq.s32.totalorder %s19, 1
      %p132 = por %p130, %p131
      %p133 = scmp.ne.s32.totalorder %s125, %s128
      %p134 = scmp.eq.s32.totalorder %s19, 0
      %p135 = por %p133, %p134
      %p136 = scmp.ne.s32.totalorder %s125, %s128
      %p137 = scmp.eq.s32.totalorder %s24, 1
      %p138 = por %p136, %p137
      %p139 = scmp.ne.s32.totalorder %s128, %s129
      %p140 = scmp.eq.s32.totalorder %s24, 0
      %p141 = por %p139, %p140
      %p142 = scmp.ne.s32.totalorder %s128, %s129
      %p143 = scmp.eq.s32.totalorder %s25, 1
      %p144 = por %p142, %p143
      %p146 = scmp.ne.s32.totalorder %s129, %s145
      %p147 = scmp.eq.s32.totalorder %s25, 0
      %p148 = por %p146, %p147
      %s149 = ssub.s32 %s26, %s38
      %p150 = scmp.eq.s32.totalorder %s149, 0
      %s152 = sadd.s32 %s151, 1
      %s153 = scalar_select %p150, %s151, %s152
      %p156 = pneg %p150
      %p157 = scmp.eq.s32.totalorder %s19, 1
      %p158 = por %p156, %p157
      %p159 = scmp.ne.s32.totalorder %s151, %s154
      %p160 = scmp.eq.s32.totalorder %s19, 0
      %p161 = por %p159, %p160
      %p162 = scmp.ne.s32.totalorder %s151, %s154
      %p163 = scmp.eq.s32.totalorder %s24, 1
      %p164 = por %p162, %p163
      %p165 = scmp.ne.s32.totalorder %s154, %s155
      %p166 = scmp.eq.s32.totalorder %s24, 0
      %p167 = por %p165, %p166
      %p168 = scmp.ne.s32.totalorder %s154, %s155
      %p169 = scmp.eq.s32.totalorder %s25, 1
      %p170 = por %p168, %p169
      %p172 = scmp.ne.s32.totalorder %s155, %s171
      %p173 = scmp.eq.s32.totalorder %s25, 0
      %p174 = por %p172, %p173
      %p175 = scmp.le.s32.totalorder 1, %s19
      %p176 = scmp.lt.s32.totalorder %s19, 3
      %p177 = pnand %p175, %p176
      %p178 = pneg %p177
      // Predicated region
      $region9: #{tpu_custom_call.1} parent=5 // pred_check
        _
      $region10: #{tpu_custom_call.1} parent=5 // pred_check_branch
        %180 = sbr.rel (%p177) target = $region12
      $region11: #{tpu_custom_call.1} parent=5 // pred_region
        %s181 = ssub.s32 %s19, 1
      $region12: #{tpu_custom_call.1} parent=5 // pred_fallthru
        _
      %p182 = scmp.lt.s32.totalorder %s19, 2
      // Predicated region
      $region13: #{tpu_custom_call.1} parent=5 // pred_check
        %p183 = pneg %p182
      $region14: #{tpu_custom_call.1} parent=5 // pred_check_branch
        %185 = sbr.rel (%p183) target = $region16
      $region15: #{tpu_custom_call.1} parent=5 // pred_region
        // Predicated region
        $region17: #{tpu_custom_call.1} parent=15 // pred_check
          %p186 = pneg %p53
        $region18: #{tpu_custom_call.1} parent=15 // pred_check_branch
          %188 = sbr.rel (%p186) target = $region20
        $region19: #{tpu_custom_call.1} parent=15 // pred_region
          %s189 = sand.u32 %s43, 1
          %s190 = scalar_lea.sflag [#allocation5], %s189
          %s191 = sand.u32 %s43, 1
          %s192 = smul.addr %s191, 8
          %s193 = scalar_lea.vmem [#allocation4], %s192
          %s194 = smul.u32 2, %s27
          %196 = vsyncadd %s190, 0
          %s197 = smul.addr %s26, 2
          %s198 = sadd.s32 %s194, %s197
          %s199 = smul.addr %s198, 4
          %s200 = scalar_lea.hbm %s0, %s199
          %s201 = sshll.u32 %s200, 4
          %s202 = int_to_ptr.hbm [resolvable:$true] %s201
          %s203 = sshll.u32 %s193, 4
          %s204 = int_to_ptr.vmem [resolvable:$true] %s203
          %209 = dma.hbm_to_vmem [thread:$0]  %s202, 128, %s204, %s190, 64, 64, 4
        $region20: #{tpu_custom_call.1} parent=15 // pred_fallthru
          _
        // Predicated region
        $region21: #{tpu_custom_call.1} parent=15 // pred_check
          %p210 = pneg %p81
        $region22: #{tpu_custom_call.1} parent=15 // pred_check_branch
          %212 = sbr.rel (%p210) target = $region24
        $region23: #{tpu_custom_call.1} parent=15 // pred_region
          %s213 = sand.u32 %s19, 1
          %s214 = scalar_lea.sflag [#allocation7], %s213
          %s215 = sand.u32 %s71, 1
          %s216 = smul.addr %s215, 8
          %s217 = scalar_lea.vmem [#allocation6], %s216
          %s218 = smul.u32 2, %s27
          %220 = vsyncadd %s214, 0
          %s221 = smul.addr %s26, 2
          %s222 = sadd.s32 %s218, %s221
          %s223 = smul.addr %s222, 4
          %s224 = scalar_lea.hbm %s1, %s223
          %s225 = sshll.u32 %s224, 4
          %s226 = int_to_ptr.hbm [resolvable:$true] %s225
          %s227 = sshll.u32 %s217, 4
          %s228 = int_to_ptr.vmem [resolvable:$true] %s227
          %233 = dma.hbm_to_vmem [thread:$0]  %s226, 128, %s228, %s214, 64, 64, 4
        $region24: #{tpu_custom_call.1} parent=15 // pred_fallthru
          _
        // Predicated region
        $region25: #{tpu_custom_call.1} parent=15 // pred_check
          %p234 = pneg %p109
        $region26: #{tpu_custom_call.1} parent=15 // pred_check_branch
          %236 = sbr.rel (%p234) target = $region28
        $region27: #{tpu_custom_call.1} parent=15 // pred_region
          %s237 = sand.u32 %s19, 1
          %s238 = scalar_lea.sflag [#allocation7], %s237
          %s239 = sand.u32 %s99, 1
          %s240 = smul.addr %s239, 8
          %s241 = scalar_lea.vmem [#allocation8], %s240
          %s242 = smul.u32 2, %s27
          %244 = vsyncadd %s238, 0
          %s245 = smul.addr %s26, 2
          %s246 = sadd.s32 %s242, %s245
          %s247 = smul.addr %s246, 4
          %s248 = scalar_lea.hbm %s2, %s247
          %s249 = sshll.u32 %s248, 4
          %s250 = int_to_ptr.hbm [resolvable:$true] %s249
          %s251 = sshll.u32 %s241, 4
          %s252 = int_to_ptr.vmem [resolvable:$true] %s251
          %257 = dma.hbm_to_vmem [thread:$0]  %s250, 128, %s252, %s238, 64, 64, 4
        $region28: #{tpu_custom_call.1} parent=15 // pred_fallthru
          _
        // Predicated region
        $region29: #{tpu_custom_call.1} parent=15 // pred_check
          %p258 = pneg %p135
        $region30: #{tpu_custom_call.1} parent=15 // pred_check_branch
          %260 = sbr.rel (%p258) target = $region32
        $region31: #{tpu_custom_call.1} parent=15 // pred_region
          %s261 = sand.u32 %s125, 1
          %s262 = scalar_lea.sflag [#allocation10], %s261
          %s263 = sand.u32 %s125, 1
          %s264 = smul.addr %s263, 8
          %s265 = scalar_lea.vmem [#allocation9], %s264
          %267 = vsyncadd %s262, 0
          %s268 = smul.addr %s26, 2
          %s269 = smul.addr %s268, 4
          %s270 = scalar_lea.hbm %s3, %s269
          %s271 = sshll.u32 %s270, 4
          %s272 = int_to_ptr.hbm [resolvable:$true] %s271
          %s273 = sshll.u32 %s265, 4
          %s274 = int_to_ptr.vmem [resolvable:$true] %s273
          %279 = dma.hbm_to_vmem [thread:$0]  %s272, 128, %s274, %s262, 64, 64, 4
        $region32: #{tpu_custom_call.1} parent=15 // pred_fallthru
          _
      $region16: #{tpu_custom_call.1} parent=5 // pred_fallthru
        _
      %p280 = scmp.le.s32.totalorder 1, %s19
      %p281 = scmp.lt.s32.totalorder %s19, 3
      %p282 = pnand %p280, %p281
      %p283 = pneg %p282
      // Predicated region
      $region33: #{tpu_custom_call.1} parent=5 // pred_check
        _
      $region34: #{tpu_custom_call.1} parent=5 // pred_check_branch
        %285 = sbr.rel (%p282) target = $region36
      $region35: #{tpu_custom_call.1} parent=5 // pred_region
        %s286 = ssub.s32 %s19, 1
        %s287 = sand.u32 %s46, 1
        %s288 = scalar_lea.sflag [#allocation5], %s287
        %s289 = sand.u32 %s46, 1
        %s290 = smul.addr %s289, 8
        %s291 = scalar_lea.vmem [#allocation4], %s290
        // Predicated region
        $region37: #{tpu_custom_call.1} parent=35 // pred_check
          %p292 = pneg %p59
        $region38: #{tpu_custom_call.1} parent=35 // pred_check_branch
          %294 = sbr.rel (%p292) target = $region40
        $region39: #{tpu_custom_call.1} parent=35 // pred_region
          %296 = dma.done %s288, 128
        $region40: #{tpu_custom_call.1} parent=35 // pred_fallthru
          _
        %s297 = sand.u32 %s24, 1
        %s298 = scalar_lea.sflag [#allocation7], %s297
        %s299 = sand.u32 %s74, 1
        %s300 = smul.addr %s299, 8
        %s301 = scalar_lea.vmem [#allocation6], %s300
        // Predicated region
        $region41: #{tpu_custom_call.1} parent=35 // pred_check
          %p302 = pneg %p87
        $region42: #{tpu_custom_call.1} parent=35 // pred_check_branch
          %304 = sbr.rel (%p302) target = $region44
        $region43: #{tpu_custom_call.1} parent=35 // pred_region
          %306 = dma.done %s298, 128
        $region44: #{tpu_custom_call.1} parent=35 // pred_fallthru
          _
        %s307 = sand.u32 %s24, 1
        %s308 = scalar_lea.sflag [#allocation7], %s307
        %s309 = sand.u32 %s102, 1
        %s310 = smul.addr %s309, 8
        %s311 = scalar_lea.vmem [#allocation8], %s310
        // Predicated region
        $region45: #{tpu_custom_call.1} parent=35 // pred_check
          %p312 = pneg %p115
        $region46: #{tpu_custom_call.1} parent=35 // pred_check_branch
          %314 = sbr.rel (%p312) target = $region48
        $region47: #{tpu_custom_call.1} parent=35 // pred_region
          %316 = dma.done %s308, 128
        $region48: #{tpu_custom_call.1} parent=35 // pred_fallthru
          _
        %s317 = sand.u32 %s128, 1
        %s318 = scalar_lea.sflag [#allocation10], %s317
        %s319 = sand.u32 %s128, 1
        %s320 = smul.addr %s319, 8
        %s321 = scalar_lea.vmem [#allocation9], %s320
        // Predicated region
        $region49: #{tpu_custom_call.1} parent=35 // pred_check
          %p322 = pneg %p141
        $region50: #{tpu_custom_call.1} parent=35 // pred_check_branch
          %324 = sbr.rel (%p322) target = $region52
        $region51: #{tpu_custom_call.1} parent=35 // pred_region
          %326 = dma.done %s318, 128
        $region52: #{tpu_custom_call.1} parent=35 // pred_fallthru
          _
        %s327 = sand.u32 %s46, 1
        %s328 = scalar_lea.sflag [#allocation5], %s327
        %s329 = sand.u32 %s46, 1
        %s330 = smul.addr %s329, 8
        %s331 = scalar_lea.vmem [#allocation4], %s330
        %p332 = pneg %p59
        %p333 = pneg %p56
        %s334 = sand.u32 %s24, 1
        %s335 = scalar_lea.sflag [#allocation7], %s334
        %s336 = sand.u32 %s74, 1
        %s337 = smul.addr %s336, 8
        %s338 = scalar_lea.vmem [#allocation6], %s337
        %p339 = pneg %p87
        %p340 = pneg %p84
        %s341 = sand.u32 %s24, 1
        %s342 = scalar_lea.sflag [#allocation7], %s341
        %s343 = sand.u32 %s102, 1
        %s344 = smul.addr %s343, 8
        %s345 = scalar_lea.vmem [#allocation8], %s344
        %p346 = pneg %p115
        %p347 = pneg %p112
        %s348 = sand.u32 %s128, 1
        %s349 = scalar_lea.sflag [#allocation10], %s348
        %s350 = sand.u32 %s128, 1
        %s351 = smul.addr %s350, 8
        %s352 = scalar_lea.vmem [#allocation9], %s351
        %p353 = pneg %p141
        %p354 = pneg %p138
        %p355 = pneg %p167
        %p356 = pneg %p164
        %p357 = scmp.lt.s32.totalorder %s28, 1
        %s358 = scalar_select %p357, %s28, 1
        %s359 = smul.addr %s358, 4
        %s360 = scalar_lea.vmem %s4, %s359
        %s361 = smul.u32 2, %s29
        %s362 = smul.u32 2, %s29
        %s363 = smul.u32 2, %s29
        %p364 = scmp.lt.s32.totalorder %s28, 1
        %s365 = scalar_select %p364, %s28, 1
        %s366 = smul.addr %s365, 4
        %s367 = scalar_lea.vmem %s4, %s366
        %p368 = scmp.eq.s32.totalorder %s29, 0
        // Predicated region
        $region53: #{tpu_custom_call.1} parent=35 // pred_check
          %p369 = pneg %p368
        $region54: #{tpu_custom_call.1} parent=35 // pred_check_branch
          %371 = sbr.rel (%p369) target = $region56
        $region55: #{tpu_custom_call.1} parent=35 // pred_region
          %vm372 = vcmask 125952
          %373 = vst.msk [vmem:[#allocation2] sm:$0xf] %vm372, 0.0
        $region56: #{tpu_custom_call.1} parent=35 // pred_fallthru
          _
        %v374 = vld [vmem:[%s311] sm:$0xf]
        %v375 = vld [vmem:[%s311 + $0x4] sm:$0xf]
        %v376 = vunpack.c.l.bf16 %v374
        %v377 = vunpack.c.l.bf16 %v375
        %v378 = vld [vmem:[%s291] sm:$0xf]
        %v379 = vld [vmem:[%s291 + $0x4] sm:$0xf]
        %v380 = vunpack.c.l.bf16 %v378
        %v381 = vunpack.c.l.bf16 %v379
        %v382 = vmul.f32 %v380, 0.5
        %v383 = vmul.f32 %v381, 0.5
        %v384 = vtanh.pop %v382
        %v385 = vtanh.pop %v383
        %v386 = vmul.f32 %v384, 0.5
        %v387 = vmul.f32 %v385, 0.5
        %v388 = vadd.f32 %v386, 0.5
        %v389 = vadd.f32 %v387, 0.5
        %v390 = vld [vmem:[#allocation2] sm:$0x1]
        %v391 = vmul.f32 %v388, %v376
        %v392 = vmul.f32 %v389, %v377
        %vm393 = vcmask 130048
        %v394 = vsel %vm393, %v391, 0.0
        %v395 = vsel %vm393, %v392, 0.0
        %v396 = vadd.f32 %v394, %v395
        %v397 = vrot.slane %v396, 4
        %v398 = vadd.f32 %v396, %v397
        %v399 = vrot.slane %v398, 2
        %v400 = vadd.f32 %v398, %v399
        %v401 = vrot.slane %v400, 1
        %v402 = vadd.f32 %v400, %v401
        %v403 = vadd.f32 %v390, %v402
        %vm404 = vcmask 122880
        %405 = vst.msk [vmem:[#allocation2] sm:$0x1] %vm404, %v403
        %v406 = vld [vmem:[#allocation2 + $0x1] sm:$0x1]
        %v407 = vsel %vm393, %v388, 0.0
        %v408 = vsel %vm393, %v389, 0.0
        %v409 = vadd.f32 %v407, %v408
        %v410 = vrot.slane %v409, 4
        %v411 = vadd.f32 %v409, %v410
        %v412 = vrot.slane %v411, 2
        %v413 = vadd.f32 %v411, %v412
        %v414 = vrot.slane %v413, 1
        %v415 = vadd.f32 %v413, %v414
        %v416 = vadd.f32 %v406, %v415
        %417 = vst.msk [vmem:[#allocation2 + $0x1] sm:$0x1] %vm404, %v416
        %v418 = vld [vmem:[#allocation2 + $0x2] sm:$0x1]
        %v419 = vsel %vm393, %v376, 0.0
        %v420 = vsel %vm393, %v377, 0.0
        %v421 = vadd.f32 %v419, %v420
        %v422 = vrot.slane %v421, 4
        %v423 = vadd.f32 %v421, %v422
        %v424 = vrot.slane %v423, 2
        %v425 = vadd.f32 %v423, %v424
        %v426 = vrot.slane %v425, 1
        %v427 = vadd.f32 %v425, %v426
        %v428 = vadd.f32 %v418, %v427
        %429 = vst.msk [vmem:[#allocation2 + $0x2] sm:$0x1] %vm404, %v428
        %v430 = vlaneseq
        %v431 = vand.u32 %v430, 127
        %vm432 = vcmp.ge.s32.totalorder %v431, 1
        %vm433 = vcmp.le.s32.totalorder %v431, 14
        %v434 = vlaneseq
        %v435 = vshrl.u32 %v434, 7
        %v436 = vadd.s32 %v435, 8
        %vm437 = vcmp.ge.s32.totalorder %v435, 1
        %vm438 = vcmp.ge.s32.totalorder %v436, 1
        %vm439 = vcmp.le.s32.totalorder %v435, 14
        %vm440 = vcmp.le.s32.totalorder %v436, 14
        %p441 = scmp.gt.s32.totalorder %s29, 0
        %v442 = vld [vmem:[#allocation3] sm:$0x1]
        %s443 = scalar_select %p441, 1, 0
        %v444 = vstv %s443
        %vm445 = vcmp.eq.s32.totalorder %v444, 1
        %v446 = vsel %vm445, %v442, 0.0
        %p447 = scmp.lt.s32.totalorder %s29, 0
        %v448 = vld [vmem:[%s321] sm:$0xf]
        %v449 = vunpack.c.l.bf16 %v448
        %s450 = scalar_select %p447, 1, 0
        %v451 = vstv %s450
        %vm452 = vcmp.eq.s32.totalorder %v451, 1
        %v453 = vsel %vm452, %v449, 0.0
        %v454 = vrot.slane %v376, 7
        %v455 = vrot.slane %v377, 7
        %vm456 = vcmp.lt.s32.totalorder %v435, 1
        %v457 = vsel %vm456, %v454, %v455
        %v458 = vsel %vm456, %v455, %v454
        %v459 = vsel %vm437, 1, 0
        %v460 = vsel %vm438, 1, 0
        %vm461 = vcmp.eq.s32.totalorder %v459, 1
        %vm462 = vcmp.eq.s32.totalorder %v460, 1
        %v464 = vperm.slane %v446, 0
        %v466 = vsel %vm461, %v458, %v464
        %v467 = vsel %vm462, %v457, %v464
        %v468 = vrot.slane %v376, 1
        %v469 = vrot.slane %v377, 1
        %vm470 = vcmp.lt.s32.totalorder %v435, 7
        %v471 = vsel %vm470, %v468, %v469
        %v472 = vsel %vm470, %v469, %v468
        %v473 = vsel %vm439, 1, 0
        %v474 = vsel %vm440, 1, 0
        %vm475 = vcmp.eq.s32.totalorder %v473, 1
        %vm476 = vcmp.eq.s32.totalorder %v474, 1
        %v477 = vperm.slane %v453, 0
        %v478 = vsel %vm475, %v471, %v477
        %v479 = vsel %vm476, %v472, %v477
        %v480 = vmul.f32 %v376, 2.0
        %v481 = vmul.f32 %v377, 2.0
        %v482 = vadd.f32 %v466, %v480
        %v483 = vadd.f32 %v467, %v481
        %v484 = vadd.f32 %v482, %v478
        %v485 = vadd.f32 %v483, %v479
        %vm486 = vcmask 1047680
        %487 = vrot.lane.b32.xlu0 %v484, 16
        %v488 = vpop.permute.xlu0 %487
        %v489 = vsel %vm486, %v488, %v484
        %490 = vrot.lane.b32.xlu0 %v485, 16
        %v491 = vpop.permute.xlu0 %490
        %v492 = vsel %vm486, %v491, %v485
        %493 = vrot.lane.b32.xlu0 %v489, 16
        %v494 = vpop.permute.xlu0 %493
        %495 = vrot.lane.b32.xlu0 %v492, 16
        %v496 = vpop.permute.xlu0 %495
        %v497 = vsel %vm486, %v494, %v484
        %v498 = vsel %vm486, %v496, %v485
        %v499 = vsel %vm433, 1, 0
        %vm500 = vcmp.eq.s32.totalorder %v499, 1
        %503 = vrot.lane.b32.xlu0 %v497, 127
        %v504 = vpop.permute.xlu0 %503
        %505 = vrot.lane.b32.xlu0 %v498, 127
        %v506 = vpop.permute.xlu0 %505
        %v509 = vsel %vm500, %v504, 0.0
        %v510 = vsel %vm500, %v506, 0.0
        %v511 = vsel %vm432, 1, 0
        %vm512 = vcmp.eq.s32.totalorder %v511, 1
        %513 = vrot.lane.b32.xlu0 %v497, 113
        %v514 = vpop.permute.xlu0 %513
        %515 = vrot.lane.b32.xlu0 %v498, 113
        %v516 = vpop.permute.xlu0 %515
        %v519 = vsel %vm512, %v514, 0.0
        %v520 = vsel %vm512, %v516, 0.0
        %v521 = vsub.f32 %v509, %v519
        %v522 = vsub.f32 %v510, %v520
        %523 = vrot.lane.b32.xlu0 %v376, 16
        %v524 = vpop.permute.xlu0 %523
        %v525 = vsel %vm486, %v524, %v376
        %526 = vrot.lane.b32.xlu0 %v377, 16
        %v527 = vpop.permute.xlu0 %526
        %v528 = vsel %vm486, %v527, %v377
        %529 = vrot.lane.b32.xlu0 %v525, 16
        %v530 = vpop.permute.xlu0 %529
        %531 = vrot.lane.b32.xlu0 %v528, 16
        %v532 = vpop.permute.xlu0 %531
        %v533 = vsel %vm486, %v530, %v376
        %v534 = vsel %vm486, %v532, %v377
        %537 = vrot.lane.b32.xlu0 %v533, 113
        %v538 = vpop.permute.xlu0 %537
        %539 = vrot.lane.b32.xlu0 %v534, 113
        %v540 = vpop.permute.xlu0 %539
        %v543 = vsel %vm512, %v538, 0.0
        %v544 = vsel %vm512, %v540, 0.0
        %545 = vrot.lane.b32.xlu0 %v533, 127
        %v546 = vpop.permute.xlu0 %545
        %547 = vrot.lane.b32.xlu0 %v534, 127
        %v548 = vpop.permute.xlu0 %547
        %v551 = vsel %vm500, %v546, 0.0
        %v552 = vsel %vm500, %v548, 0.0
        %v553 = vadd.f32 %v543, %v480
        %v554 = vadd.f32 %v544, %v481
        %v555 = vadd.f32 %v553, %v551
        %v556 = vadd.f32 %v554, %v552
        %557 = vrot.lane.b32.xlu0 %v446, 16
        %v558 = vpop.permute.xlu0 %557
        %v559 = vsel %vm486, %v558, %v446
        %560 = vrot.lane.b32.xlu0 %v559, 16
        %v561 = vpop.permute.xlu0 %560
        %v562 = vsel %vm486, %v561, %v446
        %564 = vrot.lane.b32.xlu0 %v562, 113
        %v565 = vpop.permute.xlu0 %564
        %v567 = vsel %vm432, %v565, 0.0
        %568 = vrot.lane.b32.xlu0 %v562, 127
        %v569 = vpop.permute.xlu0 %568
        %v571 = vsel %vm433, %v569, 0.0
        %v572 = vmul.f32 %v446, 2.0
        %v573 = vadd.f32 %v567, %v572
        %v574 = vadd.f32 %v573, %v571
        %575 = vrot.lane.b32.xlu0 %v453, 16
        %v576 = vpop.permute.xlu0 %575
        %v577 = vsel %vm486, %v576, %v453
        %578 = vrot.lane.b32.xlu0 %v577, 16
        %v579 = vpop.permute.xlu0 %578
        %v580 = vsel %vm486, %v579, %v453
        %582 = vrot.lane.b32.xlu0 %v580, 113
        %v583 = vpop.permute.xlu0 %582
        %v585 = vsel %vm432, %v583, 0.0
        %586 = vrot.lane.b32.xlu0 %v580, 127
        %v587 = vpop.permute.xlu0 %586
        %v589 = vsel %vm433, %v587, 0.0
        %v590 = vmul.f32 %v453, 2.0
        %v591 = vadd.f32 %v585, %v590
        %v592 = vadd.f32 %v591, %v589
        %v593 = vrot.slane %v555, 1
        %v594 = vrot.slane %v556, 1
        %v595 = vsel %vm470, %v593, %v594
        %v596 = vsel %vm470, %v594, %v593
        %v597 = vperm.slane %v592, 0
        %v598 = vsel %vm475, %v595, %v597
        %v599 = vsel %vm476, %v596, %v597
        %v600 = vrot.slane %v555, 7
        %v601 = vrot.slane %v556, 7
        %v602 = vsel %vm456, %v600, %v601
        %v603 = vsel %vm456, %v601, %v600
        %v604 = vperm.slane %v574, 0
        %v605 = vsel %vm461, %v603, %v604
        %v606 = vsel %vm462, %v602, %v604
        %v607 = vsub.f32 %v598, %v605
        %v608 = vsub.f32 %v599, %v606
        %v609 = vand.u32 2147483647, %v521
        %v610 = vand.u32 2147483647, %v522
        %v611 = vand.u32 2147483647, %v607
        %v612 = vand.u32 2147483647, %v608
        %v613 = vadd.f32 %v609, %v611
        %v614 = vadd.f32 %v610, %v612
        %v615 = vmax.f32 %v613, 0.0
        %v616 = vmax.f32 %v614, 0.0
        %v617 = vmin.f32 %v615, 1.0
        %v618 = vmin.f32 %v616, 1.0
        %vm619 = vcmask 130055
        %620 = vst.msk [vmem:[#allocation3 - $0x7] sm:$0x80] %vm619, %v377
        %v621 = vld [vmem:[%s301] sm:$0xf]
        %v622 = vld [vmem:[%s301 + $0x4] sm:$0xf]
        %v623 = vunpack.c.l.bf16 %v621
        %v624 = vunpack.c.l.bf16 %v622
        %v625 = vmax.f32 %v623, 0.0
        %v626 = vmax.f32 %v624, 0.0
        %v627 = vmul.f32 %v623, %v617
        %v628 = vmul.f32 %v624, %v618
        %v629 = vsub.f32 %v625, %v627
        %v630 = vsub.f32 %v626, %v628
        %v631 = vand.u32 2147483647, %v623
        %v632 = vand.u32 2147483647, %v624
        %v633 = vsub.f32 0.0, %v631
        %v634 = vsub.f32 0.0, %v632
        %v635 = vmul.f32 %v633, 1.442695
        %v636 = vpow.pop %v635
        %v637 = vmul.f32 %v634, 1.442695
        %v638 = vpow.pop %v637
        %v639 = vadd.f32 %v636, 1.0
        %v640 = vlog2.pop %v639
        %v641 = vmul.f32 %v640, 0.6931472
        %v642 = vmul.f32 -0.5, %v636
        %v643 = vadd.f32 %v642, 1.0
        %v644 = vmul.f32 %v643, %v636
        %v645 = vand.u32 2147483647, %v636
        %vm646 = vcmp.lt.f32.partialorder %v645, 0.0004427343
        %v647 = vsel %vm646, %v644, %v641
        %v648 = vadd.f32 %v638, 1.0
        %v649 = vlog2.pop %v648
        %v650 = vmul.f32 %v649, 0.6931472
        %v651 = vmul.f32 -0.5, %v638
        %v652 = vadd.f32 %v651, 1.0
        %v653 = vmul.f32 %v652, %v638
        %v654 = vand.u32 2147483647, %v638
        %vm655 = vcmp.lt.f32.partialorder %v654, 0.0004427343
        %v656 = vsel %vm655, %v653, %v650
        %v657 = vadd.f32 %v629, %v647
        %v658 = vadd.f32 %v630, %v656
        %v659 = vld [vmem:[#allocation2 + $0x3] sm:$0x1]
        %v660 = vsel %vm393, %v657, 0.0
        %v661 = vsel %vm393, %v658, 0.0
        %v662 = vadd.f32 %v660, %v661
        %v663 = vrot.slane %v662, 4
        %v664 = vadd.f32 %v662, %v663
        %v665 = vrot.slane %v664, 2
        %v666 = vadd.f32 %v664, %v665
        %v667 = vrot.slane %v666, 1
        %v668 = vadd.f32 %v666, %v667
        %v669 = vadd.f32 %v659, %v668
        %670 = vst.msk [vmem:[#allocation2 + $0x3] sm:$0x1] %vm404, %v669
        // Predicated region
        $region57: #{tpu_custom_call.1} parent=35 // pred_check
          %p671 = pneg %p368
        $region58: #{tpu_custom_call.1} parent=35 // pred_check_branch
          %673 = sbr.rel (%p671) target = $region60
        $region59: #{tpu_custom_call.1} parent=35 // pred_region
          %v674 = vld [vmem:[#allocation2] sm:$0xf]
          %vm675 = vcmask 125952
          %v676 = vsel %vm675, %v674, 0.0
          %677 = vadd.xlane.f32.xlu0 %v676
          %v678 = vpop.xlane.xlu0 %677
          %vm679 = vcmask 3072
          %680 = vst.msk [vmem:[%s367] sm:$0xf] %vm679, %v678
        $region60: #{tpu_custom_call.1} parent=35 // pred_fallthru
          _
        %p681 = scmp.lt.s32.totalorder %s28, 1
        %s682 = scalar_select %p681, %s28, 1
        %s683 = smul.addr %s682, 4
        %s684 = scalar_lea.vmem %s4, %s683
        // Predicated region
        $region61: #{tpu_custom_call.1} parent=35 // pred_check
          %p685 = pneg %p164
        $region62: #{tpu_custom_call.1} parent=35 // pred_check_branch
          %687 = sbr.rel (%p685) target = $region64
        $region63: #{tpu_custom_call.1} parent=35 // pred_region
          _
        $region64: #{tpu_custom_call.1} parent=35 // pred_fallthru
          _
      $region36: #{tpu_custom_call.1} parent=5 // pred_fallthru
        _
      %p688 = scmp.le.s32.totalorder 2, %s19
      // Predicated region
      $region65: #{tpu_custom_call.1} parent=5 // pred_check
        %p689 = pneg %p688
      $region66: #{tpu_custom_call.1} parent=5 // pred_check_branch
        %691 = sbr.rel (%p689) target = $region68
      $region67: #{tpu_custom_call.1} parent=5 // pred_region
        %s692 = ssub.s32 %s19, 2
        // Predicated region
        $region69: #{tpu_custom_call.1} parent=67 // pred_check
          %p693 = pneg %p170
        $region70: #{tpu_custom_call.1} parent=67 // pred_check_branch
          %695 = sbr.rel (%p693) target = $region72
        $region71: #{tpu_custom_call.1} parent=67 // pred_region
          %p696 = scmp.lt.s32.totalorder %s30, 1
          %s697 = scalar_select %p696, %s30, 1
          %s698 = smul.addr %s697, 4
          %s699 = scalar_lea.vmem %s4, %s698
        $region72: #{tpu_custom_call.1} parent=67 // pred_fallthru
          _
      $region68: #{tpu_custom_call.1} parent=5 // pred_fallthru
        _
    $region6: #{tpu_custom_call.1} parent=1 // loop_footer
      %s23 = sadd.s32 1, %s19
    $region7: #{tpu_custom_call.1} parent=1 // loop_footer_branch
      %18 = sbr.rel target = $region3
    $region8: #{tpu_custom_call.1} parent=1 // loop_exit
      _
    %700 = vsyncpa [#allocation5], 1
    %s701 = scalar_lea.sflag [#allocation5], 1
    %702 = vsyncpa %s701, 1
    %703 = vsyncpa [#allocation7], 1
    %s704 = scalar_lea.sflag [#allocation7], 1
    %705 = vsyncpa %s704, 1
    %706 = vsyncpa [#allocation10], 1
    %s707 = scalar_lea.sflag [#allocation10], 1
    %708 = vsyncpa %s707, 1

</llo_original>
